<compile_context>
chip_gen: v7x
topology: tpu7x:2x2x1
jax: 0.10.0
libtpu: 0.0.40
codegen_flags: <defaults>
</compile_context>

<pallas_src>
import functools

import jax
import jax.numpy as jnp
from jax.experimental import pallas as pl
from jax.experimental.pallas import tpu as pltpu


def _round_up(n, m):
    return ((n + m - 1) // m) * m


def _physical_vmem_bytes():
    try:
        return int(pltpu.get_tpu_info().vmem_capacity_bytes)
    except Exception:
        return 64 * 1024 * 1024  # v7x has the smallest VMEM; safe fallback.


def _kernel(x_ref, w_ref, bias_ref, o_ref, *, add_residual):
    # x_ref:    (tile_m, lane_in)    activation rows (lane-dense where possible)
    # w_ref:    (lane_in, lane_out)  fused weight  diag(g) @ W^T @ diag(scale) [+ I]
    # bias_ref: (1, lane_out)        fused bias    (b @ W^T + fb) * scale   (f32)
    # o_ref:    (tile_m, lane_out)
    x = x_ref[...]
    y = jnp.dot(x, w_ref[...], preferred_element_type=jnp.float32)
    y = y + bias_ref[...]
    if add_residual:  # residual kept out of the matmul for exactness
        y = y + x.astype(jnp.float32)
    o_ref[...] = y.astype(o_ref.dtype)


@functools.partial(jax.jit, static_argnames=("tile_m_max",))
def pre_affine_post_layer_scale(x, g, b, w_t, fb, scale, *, tile_m_max=2048):
    """x: (B, N, D). g, b, fb, scale: (D,). w_t: (D, D) = W.T of Linear(dim, dim)."""
    assert tile_m_max % 16 == 0  # sublane quantum: 8 (f32) / 16 (bf16)
    B, N, D = x.shape
    rows = B * N
    dt = x.dtype
    itemsize = jnp.dtype(dt).itemsize
    sub = 16 if itemsize <= 2 else 8
    f32 = jnp.float32

    # ---- Fold affine + layer-scale into the weight and a single bias:
    #   ((x*g + b) @ W^T + fb) * scale + x = x @ (diag(g) W^T diag(scale)) + bias' + x
    w_fold = (g.astype(f32)[:, None] * w_t.astype(f32)) * scale.astype(f32)[None, :]
    bias_fold = (b.astype(f32) @ w_t.astype(f32) + fb.astype(f32)) * scale.astype(f32)

    # ---- Lane layout (lane-dense output is the biggest measured single lever).
    pack = 128 // D if (D < 128 and 128 % D == 0) else 1
    if D % 128 == 0:
        mode = "dense"
    elif pack > 1 and rows % pack == 0:
        mode = "kron"
    else:
        mode = "lanepad"

    add_residual = True
    if mode == "dense":
        lane_in = lane_out = D
        x2d = x.reshape(rows, D)
        w_k = w_fold
        bias_k = bias_fold.reshape(1, lane_out)
        n_rows = rows
    elif mode == "kron":
        lane_in = lane_out = pack * D
        x2d = x.reshape(rows // pack, lane_in)  # free view (row-major contiguous)
        # Keep the block-diagonal kron weight: the zero-block FLOPs are free
        # under the HBM roofline; an in-kernel repack would force a relayout.
        w_k = jnp.kron(jnp.eye(pack, dtype=f32), w_fold)
        bias_k = jnp.tile(bias_fold, pack).reshape(1, lane_out)
        n_rows = rows // pack
    else:  # "lanepad": D doesn't divide 128 (or rows % pack != 0)
        lane_in = D
        lane_out = _round_up(D, 128)
        x2d = x.reshape(rows, D)
        # Fold the residual into the weight (+I) so the output is lane-dense
        # without a padded copy of x.
        w_sq = w_fold + jnp.eye(D, dtype=f32)
        w_k = jnp.zeros((D, lane_out), f32).at[:, :D].set(w_sq)
        bias_k = jnp.zeros((1, lane_out), f32).at[0, :D].set(bias_fold)
        add_residual = False
        n_rows = rows

    # Weight stored in the activation dtype (bf16 halves resident VMEM + HBM
    # bytes); accumulation stays f32.  Bias stays f32 (added post-accumulate).
    w_k = w_k.astype(dt)
    bias_k = bias_k.astype(f32)

    # ---- Row tile: as big as VMEM comfortably allows (per-grid-step fixed cost
    #      ~0.35us; 512-row tiles are overhead-dominated, esp. on v7x HBM).
    phys_vmem = _physical_vmem_bytes()
    w_bytes = lane_in * lane_out * itemsize
    single_buffer_w = w_bytes >= (8 << 20)  # large resident weight (e.g. D>=1536)
    w_bufs = 1 if single_buffer_w else 2
    budget = int(phys_vmem * 0.75)
    per_row_bytes = 2 * (lane_in + lane_out) * itemsize  # double-buffered in+out
    avail = budget - w_bufs * w_bytes - 4 * lane_out * 4
    tile_cap = max(sub, (max(avail, 0) // per_row_bytes) // sub * sub)
    tile_limit = min(tile_m_max, tile_cap)
    # TODO(synk): if the single-buffered weight alone exceeds the VMEM budget
    # (extreme D), add a K-tiled weight loop instead of a resident weight.

    if n_rows <= tile_limit:
        tile_m = n_rows           # single block; block == full array dim is legal
    else:
        tile_m = tile_limit       # multiple of the sublane quantum
    grid_m = pl.cdiv(n_rows, tile_m)  # ragged last block handled by Pallas masking

    x_spec = pl.BlockSpec((tile_m, lane_in), lambda i: (i, 0))
    o_spec = pl.BlockSpec((tile_m, lane_out), lambda i: (i, 0))
    bias_spec = pl.BlockSpec((1, lane_out), lambda i: (0, 0))
    if single_buffer_w:
        # Don't double-buffer a huge constant weight (D=3072 f32 would be 72 MiB
        # double-buffered, exceeding v7x's 64 MiB physical VMEM).
        w_spec = pl.BlockSpec((lane_in, lane_out), lambda i: (0, 0),
                              pipeline_mode=pl.Buffered(1))
    else:
        w_spec = pl.BlockSpec((lane_in, lane_out), lambda i: (0, 0))

    vmem_needed = (2 * tile_m * (lane_in + lane_out) * itemsize
                   + w_bufs * w_bytes + 2 * lane_out * 4)
    vmem_limit = int(max(32 << 20, min(vmem_needed + (8 << 20), int(phys_vmem * 0.9))))

    cost = pl.CostEstimate(
        flops=2 * rows * D * D,  # true useful flops (no kron-zero blocks)
        bytes_accessed=(rows * D * itemsize            # x read
                        + n_rows * lane_out * itemsize  # out write
                        + lane_in * lane_out * itemsize  # weight
                        + lane_out * 4),                 # bias
        transcendentals=0,
    )

    out = pl.pallas_call(
        functools.partial(_kernel, add_residual=add_residual),
        out_shape=jax.ShapeDtypeStruct((n_rows, lane_out), dt),
        grid_spec=pltpu.PrefetchScalarGridSpec(
            num_scalar_prefetch=0,
            grid=(grid_m,),
            in_specs=[x_spec, w_spec, bias_spec],
            out_specs=o_spec,
        ),
        compiler_params=pltpu.CompilerParams(
            # Row axis is embarrassingly parallel -> megacore / v7x 2-TC sharding.
            # TODO(synk): sweep pltpu.CORE_PARALLEL here on v7x.
            dimension_semantics=("parallel",),
            vmem_limit_bytes=vmem_limit,
        ),
        cost_estimate=cost,
    )(x2d, w_k, bias_k)

    if mode == "lanepad":
        # TODO(synk): this slice is an extra copy; still cheaper than masked stores.
        out = out[:, :D]
    return out.reshape(B, N, D)


def _reference(x, g, b, w_t, fb, scale):
    affine = x * g.reshape(1, 1, -1) + b.reshape(1, 1, -1)
    y = jnp.einsum("bnd,de->bne", affine, w_t) + fb.reshape(1, 1, -1)
    return y * scale.reshape(1, 1, -1) + x


if __name__ == "__main__":
    # Module config: dim=32, depth=12 (<=18 -> init_eps = 0.1), fn = Linear(dim, dim)
    dim = 32
    depth = 12
    init_eps = 0.1 if depth <= 18 else (1e-5 if depth <= 24 else 1e-6)

    key = jax.random.PRNGKey(0)
    kx, kw, kfb, kg, kb, kx2, kx3 = jax.random.split(key, 7)

    # Affine params: module inits g=ones, b=zeros; perturb slightly so the
    # folded-weight path is actually exercised (as after training).
    g = 1.0 + 0.1 * jax.random.normal(kg, (dim,), dtype=jnp.float32)
    b = 0.05 * jax.random.normal(kb, (dim,), dtype=jnp.float32)
    scale = jnp.full((dim,), init_eps, dtype=jnp.float32)
    w = jax.random.normal(kw, (dim, dim), dtype=jnp.float32) / jnp.sqrt(dim)
    fb = 0.01 * jax.random.normal(kfb, (dim,), dtype=jnp.float32)
    w_t = w.T  # kernel consumes (in, out)

    # 1) f32, lane-packed (kron) path, single block.
    x = jax.random.normal(kx, (2, 16, dim), dtype=jnp.float32)
    out = jax.block_until_ready(pre_affine_post_layer_scale(x, g, b, w_t, fb, scale))
    ref = _reference(x, g, b, w_t, fb, scale)
    assert out.shape == x.shape
    assert jnp.allclose(out, ref, atol=1e-4, rtol=1e-4), "f32 mismatch vs reference"

    # 2) Ragged multi-step grid (no wrapper-side padding of x).
    x2 = jax.random.normal(kx2, (2, 40, dim), dtype=jnp.float32)
    out2 = jax.block_until_ready(
        pre_affine_post_layer_scale(x2, g, b, w_t, fb, scale, tile_m_max=16))
    ref2 = _reference(x2, g, b, w_t, fb, scale)
    assert jnp.allclose(out2, ref2, atol=1e-4, rtol=1e-4), "ragged-grid mismatch"

    # 3) bf16 I/O path (bf16 weight, f32 accumulation).
    x3 = jax.random.normal(kx3, (2, 32, dim), dtype=jnp.float32).astype(jnp.bfloat16)
    out3 = jax.block_until_ready(pre_affine_post_layer_scale(x3, g, b, w_t, fb, scale))
    ref3 = _reference(x3.astype(jnp.float32), g, b, w_t, fb, scale)
    assert jnp.allclose(out3.astype(jnp.float32), ref3, atol=5e-2, rtol=5e-2), \
        "bf16 mismatch vs reference"

    print("KERNEL_OK")
</pallas_src>

<mosaic_0001>
module attributes {stable_mosaic.version = 11 : i64} {
  func.func @_kernel(%arg0: i32, %arg1: memref<8x128xf32, #tpu.memory_space<vmem>>, %arg2: memref<128x128xf32, #tpu.memory_space<vmem>>, %arg3: memref<1x128xf32, #tpu.memory_space<vmem>>, %arg4: memref<8x128xf32, #tpu.memory_space<vmem>>) attributes {dimension_semantics = [#tpu.dimension_semantics<parallel>], iteration_bounds = array<i64: 1>, scalar_prefetch = 0 : i64, scratch_operands = 0 : i64, tpu.core_type = #tpu.core_type<tc>, window_params = [{transform_indices = @transform_0, window_bounds = array<i64: 8, 128>}, {pipeline_mode = #tpu.pipeline_mode<synchronous>, transform_indices = @transform_1, window_bounds = array<i64: 128, 128>}, {pipeline_mode = #tpu.pipeline_mode<synchronous>, transform_indices = @transform_2, window_bounds = array<i64: 1, 128>}, {transform_indices = @transform_3, window_bounds = array<i64: 8, 128>}]} {
    %c0 = arith.constant 0 : index
    %c0_0 = arith.constant 0 : index
    %0 = vector.load %arg1[%c0, %c0_0] : memref<8x128xf32, #tpu.memory_space<vmem>>, vector<8x128xf32>
    %c0_1 = arith.constant 0 : index
    %c0_2 = arith.constant 0 : index
    %1 = vector.load %arg2[%c0_1, %c0_2] : memref<128x128xf32, #tpu.memory_space<vmem>>, vector<128x128xf32>
    %cst = arith.constant dense<0.000000e+00> : vector<8x128xf32>
    %2 = tpu.matmul %0, %1, %cst {dimension_numbers = #tpu.dot_dimension_numbers<[1], [0], [0], [1], [0, 0, 1, 1], [], []>} : vector<8x128xf32>, vector<128x128xf32>, vector<8x128xf32> -> vector<8x128xf32>
    %c0_3 = arith.constant 0 : index
    %c0_4 = arith.constant 0 : index
    %3 = vector.load %arg3[%c0_3, %c0_4] : memref<1x128xf32, #tpu.memory_space<vmem>>, vector<1x128xf32>
    %4 = vector.broadcast %3 : vector<1x128xf32> to vector<8x128xf32>
    %5 = arith.addf %2, %4 : vector<8x128xf32>
    %6 = arith.addf %5, %0 : vector<8x128xf32>
    %c0_5 = arith.constant 0 : index
    %c0_6 = arith.constant 0 : index
    %7 = vector.load %arg4[%c0_5, %c0_6] : memref<8x128xf32, #tpu.memory_space<vmem>>, vector<8x128xf32>
    tpu.vector_store %arg4[%c0_5, %c0_6], %6 {strides = array<i32>} : memref<8x128xf32, #tpu.memory_space<vmem>>, vector<8x128xf32>,
    return
  }
  func.func @transform_0(%arg0: i32) -> (i32, i32) {
    %c0_i32 = arith.constant 0 : i32
    %c0_i32_0 = arith.constant 0 : i32
    return %arg0, %c0_i32 : i32, i32
  }
  func.func @transform_1(%arg0: i32) -> (i32, i32) {
    %c0_i32 = arith.constant 0 : i32
    %c0_i32_0 = arith.constant 0 : i32
    %c0_i32_1 = arith.constant 0 : i32
    return %c0_i32, %c0_i32_0 : i32, i32
  }
  func.func @transform_2(%arg0: i32) -> (i32, i32) {
    %c0_i32 = arith.constant 0 : i32
    %c0_i32_0 = arith.constant 0 : i32
    %c0_i32_1 = arith.constant 0 : i32
    return %c0_i32, %c0_i32_0 : i32, i32
  }
  func.func @transform_3(%arg0: i32) -> (i32, i32) {
    %c0_i32 = arith.constant 0 : i32
    %c0_i32_0 = arith.constant 0 : i32
    return %arg0, %c0_i32 : i32, i32
  }
}

</mosaic_0001>

<llo_original>
// kernel: tile.8
$region0: #{tile.8}
  #allocation0 [shape = 's32[1]{0}', space=sflag, size = 0x4, scoped, tag = 'scoped memory for tile.8']
  %s0 = inlined_call_operand.vmem [shape: f32[32], index: 0, kind: input, shape index: {}]
  %s1 = inlined_call_operand.vmem [shape: f32[4,32], index: 1, kind: output, shape index: {}]
  // Predicated region
  $region2: #{tile.8} parent=0 // pred_check
    _
  $region3: #{tile.8} parent=0 // pred_check_branch
    %3 = sbr.rel (0) target = $region5
  $region4: #{tile.8} parent=0 // pred_region
    _
  $region5: #{tile.8} parent=0 // pred_fallthru
    _
  %v4 = vld [vmem:[%s0] ss:$0 sm:$0xff]
  %5 = vst [vmem:[%s1] sm:$0xf] %v4

// kernel: tile.9
$region0: #{tile.9}
  %s0 = inlined_call_operand.vmem [shape: f32[4,32], index: 0, kind: input, shape index: {}]
  %s1 = inlined_call_operand.vmem [shape: f32[1,128], index: 1, kind: output, shape index: {}]
  $region1: #{tile.9} parent=0
    #allocation0 [shape = 'u8[4096]{0}', space=vmem, size = 0x1000, scoped, tag = 'scoped mem for output reshape']
    #allocation1 [shape = 'u8[4096]{0}', space=vmem, size = 0x1000, scoped, tag = 'scoped mem for input reshape']
    %s3 = sshllo.u32 0, 4
    %v4 = vld [vmem:[%s0] sm:%s3]
    %5 = vst [vmem:[#allocation1] sm:%s3] %v4
    %v6 = vld [vmem:[#allocation1] sm:$0x1]
    %vm7 = vcmask 261120
    %8 = vst.msk [vmem:[#allocation0] sm:$0x1] %vm7, %v6
    %s9 = scalar_lea.vmem [#allocation1], 3
    %v10 = vld [vmem:[%s9] sm:$0x1]
    %11 = vrot.lane.b32.xlu0 %v10, 96
    %v12 = vpop.permute.xlu0 %11
    %vm13 = vcmask 1048320
    %14 = vst.msk [vmem:[#allocation0] sm:$0x1] %vm13, %v12
    %s15 = scalar_lea.vmem [#allocation1], 2
    %v16 = vld [vmem:[%s15] sm:$0x1]
    %17 = vrot.lane.b32.xlu0 %v16, 64
    %v18 = vpop.permute.xlu0 %17
    %vm19 = vcmask 785920
    %20 = vst.msk [vmem:[#allocation0] sm:$0x1] %vm19, %v18
    %s21 = scalar_lea.vmem [#allocation1], 1
    %v22 = vld [vmem:[%s21] sm:$0x1]
    %23 = vrot.lane.b32.xlu0 %v22, 32
    %v24 = vpop.permute.xlu0 %23
    %vm25 = vcmask 523520
    %26 = vst.msk [vmem:[#allocation0] sm:$0x1] %vm25, %v24
    %s28 = sshllo.u32 0, 1
    %v30 = vld [vmem:[#allocation0] sm:%s28]
    %s31 = sshllo.u32 0, 1
    %32 = vst [vmem:[%s1] sm:%s31] %v30

// kernel: pre_affine_post_layer_scale.1
$region0: #{pre_affine_post_layer_scale.1}
  #allocation0 [shape = 'u32[]', space=smem, size = 0x4, offset = 0x4, fixed_abs, tag = 'smem constant byte address 0x4 - core index']
  #allocation1 [shape = 'u32[144,128]{1,0:T(1,128)}', space=vmem, size = 0x12000, scoped, tag = 'internal scratch']
  %s0 = inlined_call_operand.vmem [shape: f32[8,128], index: 0, kind: input, shape index: {}]
  %s1 = inlined_call_operand.vmem [shape: f32[128,128], index: 1, kind: input, shape index: {}]
  %s2 = inlined_call_operand.vmem [shape: f32[1,128], index: 2, kind: input, shape index: {}]
  %s3 = inlined_call_operand.vmem [shape: f32[8,128], index: 3, kind: output, shape index: {}]
  %s4 = sld [smem:[#allocation0]]
  $region22: #{pre_affine_post_layer_scale.1} parent=0
    _
  %s6 = ssub.s32 1, %s4
  %s7 = scalar_select 0, %s6, %s4
  // Predicated region
  $region2: #{pre_affine_post_layer_scale.1} parent=0 // pred_check
    _
  $region3: #{pre_affine_post_layer_scale.1} parent=0 // pred_check_branch
    %9 = sbr.rel (0) target = $region5
  $region4: #{pre_affine_post_layer_scale.1} parent=0 // pred_region
    _
  $region5: #{pre_affine_post_layer_scale.1} parent=0 // pred_fallthru
    _
  // Predicated region
  $region6: #{pre_affine_post_layer_scale.1} parent=0 // pred_check
    _
  $region7: #{pre_affine_post_layer_scale.1} parent=0 // pred_check_branch
    %11 = sbr.rel (0) target = $region9
  $region8: #{pre_affine_post_layer_scale.1} parent=0 // pred_region
    _
  $region9: #{pre_affine_post_layer_scale.1} parent=0 // pred_fallthru
    _
  // Predicated region
  $region10: #{pre_affine_post_layer_scale.1} parent=0 // pred_check
    _
  $region11: #{pre_affine_post_layer_scale.1} parent=0 // pred_check_branch
    %13 = sbr.rel (0) target = $region13
  $region12: #{pre_affine_post_layer_scale.1} parent=0 // pred_region
    _
  $region13: #{pre_affine_post_layer_scale.1} parent=0 // pred_fallthru
    _
  %v14 = vld [vmem:[%s0] sm:$0xff]
  %v15 = vld [vmem:[%s1] sm:$0xff]
  %v16 = vld [vmem:[%s1 + $0x8] sm:$0xff]
  %v17 = vld [vmem:[%s1 + $0x10] sm:$0xff]
  %v18 = vld [vmem:[%s1 + $0x18] sm:$0xff]
  %v19 = vld [vmem:[%s1 + $0x20] sm:$0xff]
  %v20 = vld [vmem:[%s1 + $0x28] sm:$0xff]
  %v21 = vld [vmem:[%s1 + $0x30] sm:$0xff]
  %v22 = vld [vmem:[%s1 + $0x38] sm:$0xff]
  %v23 = vld [vmem:[%s1 + $0x40] sm:$0xff]
  %v24 = vld [vmem:[%s1 + $0x48] sm:$0xff]
  %v25 = vld [vmem:[%s1 + $0x50] sm:$0xff]
  %v26 = vld [vmem:[%s1 + $0x58] sm:$0xff]
  %v27 = vld [vmem:[%s1 + $0x60] sm:$0xff]
  %v28 = vld [vmem:[%s1 + $0x68] sm:$0xff]
  %v29 = vld [vmem:[%s1 + $0x70] sm:$0xff]
  %v30 = vld [vmem:[%s1 + $0x78] sm:$0xff]
  %v31 = vld [vmem:[%s2] sm:$0x1]
  %v33 = vlaneseq
  %v34 = vshrl.u32 %v33, 7
  %v35 = vsub.s32 0, %v34
  %v36 = vrot.slane %v31, %v35
  %38 = vmatprep.subr.mxu0 0.0
  %39 = vmatpush1.msra.mxu0 %v15
  %40 = vmatprep.subr.mxu0 0.0
  %41 = vmatpush1.msra.mxu0 %v16
  %42 = vmatprep.subr.mxu0 0.0
  %43 = vmatpush1.msra.mxu0 %v17
  %44 = vmatprep.subr.mxu0 0.0
  %45 = vmatpush1.msra.mxu0 %v18
  %46 = vmatprep.subr.mxu0 0.0
  %47 = vmatpush1.msra.mxu0 %v19
  %48 = vmatprep.subr.mxu0 0.0
  %49 = vmatpush1.msra.mxu0 %v20
  %50 = vmatprep.subr.mxu0 0.0
  %51 = vmatpush1.msra.mxu0 %v21
  %52 = vmatprep.subr.mxu0 0.0
  %53 = vmatpush1.msra.mxu0 %v22
  %54 = vmatprep.subr.mxu0 0.0
  %55 = vmatpush1.msra.mxu0 %v23
  %56 = vmatprep.subr.mxu0 0.0
  %57 = vmatpush1.msra.mxu0 %v24
  %58 = vmatprep.subr.mxu0 0.0
  %59 = vmatpush1.msra.mxu0 %v25
  %60 = vmatprep.subr.mxu0 0.0
  %61 = vmatpush1.msra.mxu0 %v26
  %62 = vmatprep.subr.mxu0 0.0
  %63 = vmatpush1.msra.mxu0 %v27
  %64 = vmatprep.subr.mxu0 0.0
  %65 = vmatpush1.msra.mxu0 %v28
  %66 = vmatprep.subr.mxu0 0.0
  %67 = vmatpush1.msra.mxu0 %v29
  %68 = vmatprep.subr.mxu0 0.0
  %69 = vmatpush1.msra.mxu0 %v30
  %70 = vmatprep.subr.mxu0 0.0
  %71 = vmatpush1.msra.mxu0 0.0
  %72 = vmatprep.subr.mxu0 0.0
  %73 = vmatpush1.msra.mxu0 0.0
  %74 = vmatprep.subr.mxu0 0.0
  %75 = vmatpush1.msra.mxu0 0.0
  %76 = vmatprep.subr.mxu0 0.0
  %77 = vmatpush1.msra.mxu0 0.0
  %78 = vmatprep.subr.mxu0 0.0
  %79 = vmatpush1.msra.mxu0 0.0
  %80 = vmatprep.subr.mxu0 0.0
  %81 = vmatpush1.msra.mxu0 0.0
  %82 = vmatprep.subr.mxu0 0.0
  %83 = vmatpush1.msra.mxu0 0.0
  %84 = vmatprep.subr.mxu0 0.0
  %85 = vmatpush1.msra.mxu0 0.0
  %86 = vmatprep.subr.mxu0 0.0
  %87 = vmatpush1.msra.mxu0 0.0
  %88 = vmatprep.subr.mxu0 0.0
  %89 = vmatpush1.msra.mxu0 0.0
  %90 = vmatprep.subr.mxu0 0.0
  %91 = vmatpush1.msra.mxu0 0.0
  %92 = vmatprep.subr.mxu0 0.0
  %93 = vmatpush1.msra.mxu0 0.0
  %94 = vmatprep.subr.mxu0 0.0
  %95 = vmatpush1.msra.mxu0 0.0
  %96 = vmatprep.subr.mxu0 0.0
  %97 = vmatpush1.msra.mxu0 0.0
  %98 = vmatprep.subr.mxu0 0.0
  %99 = vmatpush1.msra.mxu0 0.0
  %100 = vmatprep.subr.mxu0 0.0
  %101 = vmatpush1.msra.mxu0 0.0
  %102 = vmatprep.mubr.f32.mxu0 0.0
  %103 = vmatmul.mubr.f32.gmra.mrb[0].mxu0 %v14
  %v104 = vpop.f32.mrb[0].mxu0
  %v105 = vadd.f32 %v36, %v104
  %v106 = vpop.f32.mrb[0].mxu0
  %107 = vdwg.mxu0
  %v108 = vadd.f32 %v105, %v14
  %109 = vst [vmem:[%s3] sm:$0xff] %v108
  // Predicated region
  $region14: #{pre_affine_post_layer_scale.1} parent=0 // pred_check
    _
  $region15: #{pre_affine_post_layer_scale.1} parent=0 // pred_check_branch
    %111 = sbr.rel (0) target = $region17
  $region16: #{pre_affine_post_layer_scale.1} parent=0 // pred_region
    _
  $region17: #{pre_affine_post_layer_scale.1} parent=0 // pred_fallthru
    _
  // Predicated region
  $region18: #{pre_affine_post_layer_scale.1} parent=0 // pred_check
    _
  $region19: #{pre_affine_post_layer_scale.1} parent=0 // pred_check_branch
    %113 = sbr.rel (0) target = $region21
  $region20: #{pre_affine_post_layer_scale.1} parent=0 // pred_region
    _
  $region21: #{pre_affine_post_layer_scale.1} parent=0 // pred_fallthru
    _

</llo_original>
